<compile_context>
chip_gen: v5e
topology: v5e:2x2
jax: 0.10.0
libtpu: 0.0.40
codegen_flags: <defaults>
</compile_context>

<pallas_src>
import functools

import jax
import jax.numpy as jnp
import numpy as np
from jax.experimental import pallas as pl
from jax.experimental.pallas import tpu as pltpu


# ---------------------------------------------------------------------------
# Pallas kernel (single invocation, grid = ())
# ---------------------------------------------------------------------------
def _bnn_ensemble_kernel(x_ref, w1p_ref, b1p_ref, w2_ref, b2_ref,
                         w3_ref, b3_ref, w4_ref, b4_ref,
                         mu_ref, logvar_ref):
    n_models, hidden, _ = w2_ref.shape
    f32 = jnp.float32

    x = x_ref[...]                                              # [B, D_in] bf16

    # Layer 1 fused across all ensemble members (x is shared):
    #   [B, D_in] @ [D_in, n_models*H]  ->  one lane-dense MXU push.
    h1 = jnp.dot(x, w1p_ref[...], preferred_element_type=f32)   # [B, n*H] f32
    h1 = jnp.maximum(h1 + b1p_ref[...].astype(f32), 0.0)

    # Layers 2-4 per ensemble member (statically unrolled; n_models is small).
    ys = []
    for m in range(n_models):
        h = h1[:, m * hidden:(m + 1) * hidden].astype(jnp.bfloat16)
        h = jnp.dot(h, w2_ref[m], preferred_element_type=f32) + b2_ref[m].astype(f32)
        h = jnp.maximum(h, 0.0).astype(jnp.bfloat16)
        h = jnp.dot(h, w3_ref[m], preferred_element_type=f32) + b3_ref[m].astype(f32)
        h = jnp.maximum(h, 0.0).astype(jnp.bfloat16)
        y = jnp.dot(h, w4_ref[m], preferred_element_type=f32) + b4_ref[m].astype(f32)
        ys.append(y)                                            # [B, D_out] f32

    # Ensemble statistics: torch.mean / torch.var(unbiased=True) / torch.log.
    s = ys[0]
    for y in ys[1:]:
        s = s + y
    mu = s * (1.0 / n_models)

    d0 = ys[0] - mu
    ss = d0 * d0
    for y in ys[1:]:
        d = y - mu
        ss = ss + d * d
    var = ss * (1.0 / (n_models - 1))

    mu_ref[...] = mu
    logvar_ref[...] = jnp.log(var)


@jax.jit
def bnn_ensemble_forward(x_bf16, w1p, b1p, w2, b2, w3, b3, w4, b4):
    """x_bf16: [B, D_in] bf16. w1p: [D_in, n*H] bf16, b1p: [1, n*H] bf16.
    w2/w3: [n, H, H] bf16, b2/b3: [n, 1, H] bf16. w4: [n, H, D_out] bf16,
    b4: [n, 1, D_out] bf16. Returns (mu, logvar) in f32, each [B, D_out]."""
    batch = x_bf16.shape[0]
    d_out = w4.shape[2]

    vmem = lambda: pl.BlockSpec(memory_space=pltpu.MemorySpace.VMEM)

    mu, logvar = pl.pallas_call(
        _bnn_ensemble_kernel,
        out_shape=(
            jax.ShapeDtypeStruct((batch, d_out), jnp.float32),
            jax.ShapeDtypeStruct((batch, d_out), jnp.float32),
        ),
        in_specs=[vmem() for _ in range(9)],
        out_specs=(vmem(), vmem()),
        # NOTE: if hidden_dim / n_models are scaled up, set
        # compiler_params=pltpu.CompilerParams(vmem_limit_bytes=...) so the
        # (bf16) weight working set fits the scoped VMEM limit.
    )(x_bf16, w1p, b1p, w2, b2, w3, b3, w4, b4)
    return mu, logvar


# ---------------------------------------------------------------------------
# Parameter construction: BayesLinear-style sampling done once in the wrapper.
# ---------------------------------------------------------------------------
def sample_bayes_ensemble(key, input_dim, hidden_dim, output_dim, n_models,
                          prior_sigma=0.1):
    """Returns Ws, Bs: lists (per layer) of [n_models, fan_in, fan_out] /
    [n_models, fan_out] f32 sampled weights  (W = W_mu + prior_sigma * eps)."""
    dims = [(input_dim, hidden_dim), (hidden_dim, hidden_dim),
            (hidden_dim, hidden_dim), (hidden_dim, output_dim)]
    Ws, Bs = [], []
    for fan_in, fan_out in dims:
        key, kmw, kmb, kew, keb = jax.random.split(key, 5)
        bound = 1.0 / np.sqrt(fan_in)
        w_mu = jax.random.uniform(kmw, (fan_in, fan_out), jnp.float32, -bound, bound)
        b_mu = jax.random.uniform(kmb, (fan_out,), jnp.float32, -bound, bound)
        eps_w = jax.random.normal(kew, (n_models, fan_in, fan_out), jnp.float32)
        eps_b = jax.random.normal(keb, (n_models, fan_out), jnp.float32)
        Ws.append(w_mu[None] + prior_sigma * eps_w)
        Bs.append(b_mu[None] + prior_sigma * eps_b)
    return Ws, Bs


def pack_for_kernel(Ws16, Bs16):
    """Pack bf16 per-model weights for the kernel (layer 1 fused along fan_out)."""
    n_models, d_in, hidden = Ws16[0].shape
    d_out = Ws16[3].shape[2]
    w1p = jnp.transpose(Ws16[0], (1, 0, 2)).reshape(d_in, n_models * hidden)
    b1p = Bs16[0].reshape(1, n_models * hidden)
    w2, w3, w4 = Ws16[1], Ws16[2], Ws16[3]
    b2 = Bs16[1].reshape(n_models, 1, hidden)
    b3 = Bs16[2].reshape(n_models, 1, hidden)
    b4 = Bs16[3].reshape(n_models, 1, d_out)
    return w1p, b1p, w2, b2, w3, b3, w4, b4


# ---------------------------------------------------------------------------
# Pure-JAX reference (mirrors the kernel's bf16-weight / f32-accumulate precision)
# ---------------------------------------------------------------------------
def reference_forward(x, Ws16, Bs16):
    n_models = Ws16[0].shape[0]
    xb = x.astype(jnp.bfloat16).astype(jnp.float32)
    ys = []
    for m in range(n_models):
        h = xb
        for li in range(4):
            w = Ws16[li][m].astype(jnp.float32)
            b = Bs16[li][m].astype(jnp.float32)
            h = h @ w + b
            if li < 3:
                h = jnp.maximum(h, 0.0)
                h = h.astype(jnp.bfloat16).astype(jnp.float32)
        ys.append(h)
    e = jnp.stack(ys, axis=0)
    mu = jnp.mean(e, axis=0)
    var = jnp.var(e, axis=0, ddof=1)      # torch.var default: unbiased
    return mu, jnp.log(var)


if __name__ == "__main__":
    key = jax.random.PRNGKey(0)

    # Small shapes consistent with the module.
    batch, input_dim, hidden_dim, output_dim, n_models = 8, 4, 128, 4, 4
    assert n_models >= 2, "unbiased variance needs n_models >= 2 (torch semantics)"

    key, kx = jax.random.split(key)
    x = jax.random.normal(kx, (batch, input_dim), jnp.float32)

    Ws, Bs = sample_bayes_ensemble(key, input_dim, hidden_dim, output_dim, n_models)

    # bf16 copies (identical values used by both the kernel and the reference).
    Ws16 = [w.astype(jnp.bfloat16) for w in Ws]
    Bs16 = [b.astype(jnp.bfloat16) for b in Bs]
    packed = pack_for_kernel(Ws16, Bs16)
    x16 = x.astype(jnp.bfloat16)

    mu, logvar = bnn_ensemble_forward(x16, *packed)
    jax.block_until_ready((mu, logvar))

    mu_ref, logvar_ref = reference_forward(x, Ws16, Bs16)
    np.testing.assert_allclose(np.asarray(mu), np.asarray(mu_ref),
                               rtol=1e-4, atol=1e-4)
    np.testing.assert_allclose(np.asarray(logvar), np.asarray(logvar_ref),
                               rtol=1e-3, atol=1e-3)

    print("KERNEL_OK")
</pallas_src>

<mosaic_0001>
module attributes {stable_mosaic.version = 11 : i64} {
  func.func @_bnn_ensemble_kernel(%arg0: memref<8x4xbf16, #tpu.memory_space<vmem>>, %arg1: memref<4x512xbf16, #tpu.memory_space<vmem>>, %arg2: memref<1x512xbf16, #tpu.memory_space<vmem>>, %arg3: memref<4x128x128xbf16, #tpu.memory_space<vmem>>, %arg4: memref<4x1x128xbf16, #tpu.memory_space<vmem>>, %arg5: memref<4x128x128xbf16, #tpu.memory_space<vmem>>, %arg6: memref<4x1x128xbf16, #tpu.memory_space<vmem>>, %arg7: memref<4x128x4xbf16, #tpu.memory_space<vmem>>, %arg8: memref<4x1x4xbf16, #tpu.memory_space<vmem>>, %arg9: memref<8x4xf32, #tpu.memory_space<vmem>>, %arg10: memref<8x4xf32, #tpu.memory_space<vmem>>) attributes {dimension_semantics = [], scalar_prefetch = 0 : i64, scratch_operands = 0 : i64, tpu.core_type = #tpu.core_type<tc>} {
    %c0 = arith.constant 0 : index
    %c0_0 = arith.constant 0 : index
    %0 = vector.load %arg0[%c0, %c0_0] : memref<8x4xbf16, #tpu.memory_space<vmem>>, vector<8x4xbf16>
    %c0_1 = arith.constant 0 : index
    %c0_2 = arith.constant 0 : index
    %1 = vector.load %arg1[%c0_1, %c0_2] : memref<4x512xbf16, #tpu.memory_space<vmem>>, vector<4x512xbf16>
    %cst = arith.constant dense<0.000000e+00> : vector<8x512xf32>
    %2 = tpu.matmul %0, %1, %cst {dimension_numbers = #tpu.dot_dimension_numbers<[1], [0], [0], [1], [0, 0, 1, 1], [], []>} : vector<8x4xbf16>, vector<4x512xbf16>, vector<8x512xf32> -> vector<8x512xf32>
    %c0_3 = arith.constant 0 : index
    %c0_4 = arith.constant 0 : index
    %3 = vector.load %arg2[%c0_3, %c0_4] : memref<1x512xbf16, #tpu.memory_space<vmem>>, vector<1x512xbf16>
    %4 = arith.extf %3 : vector<1x512xbf16> to vector<1x512xf32>
    %5 = vector.broadcast %4 : vector<1x512xf32> to vector<8x512xf32>
    %6 = arith.addf %2, %5 : vector<8x512xf32>
    %cst_5 = arith.constant 0.000000e+00 : f32
    %7 = vector.broadcast %cst_5 : f32 to vector<8x512xf32>
    %8 = arith.maximumf %6, %7 : vector<8x512xf32>
    %9 = vector.extract_strided_slice %8 {offsets = [0, 0], sizes = [8, 128], strides = [1, 1]} : vector<8x512xf32> to vector<8x128xf32>
    %10 = arith.truncf %9 : vector<8x128xf32> to vector<8x128xbf16>
    %c0_6 = arith.constant 0 : index
    %c0_7 = arith.constant 0 : index
    %c0_8 = arith.constant 0 : index
    %11 = vector.load %arg3[%c0_6, %c0_7, %c0_8] : memref<4x128x128xbf16, #tpu.memory_space<vmem>>, vector<1x128x128xbf16>
    %12 = vector.shape_cast %11 : vector<1x128x128xbf16> to vector<128x128xbf16>
    %cst_9 = arith.constant dense<0.000000e+00> : vector<8x128xf32>
    %13 = tpu.matmul %10, %12, %cst_9 {dimension_numbers = #tpu.dot_dimension_numbers<[1], [0], [0], [1], [0, 0, 1, 1], [], []>} : vector<8x128xbf16>, vector<128x128xbf16>, vector<8x128xf32> -> vector<8x128xf32>
    %c0_10 = arith.constant 0 : index
    %c0_11 = arith.constant 0 : index
    %c0_12 = arith.constant 0 : index
    %14 = vector.load %arg4[%c0_10, %c0_11, %c0_12] : memref<4x1x128xbf16, #tpu.memory_space<vmem>>, vector<1x1x128xbf16>
    %15 = vector.shape_cast %14 : vector<1x1x128xbf16> to vector<1x128xbf16>
    %16 = arith.extf %15 : vector<1x128xbf16> to vector<1x128xf32>
    %17 = vector.broadcast %16 : vector<1x128xf32> to vector<8x128xf32>
    %18 = arith.addf %13, %17 : vector<8x128xf32>
    %cst_13 = arith.constant 0.000000e+00 : f32
    %19 = vector.broadcast %cst_13 : f32 to vector<8x128xf32>
    %20 = arith.maximumf %18, %19 : vector<8x128xf32>
    %21 = arith.truncf %20 : vector<8x128xf32> to vector<8x128xbf16>
    %c0_14 = arith.constant 0 : index
    %c0_15 = arith.constant 0 : index
    %c0_16 = arith.constant 0 : index
    %22 = vector.load %arg5[%c0_14, %c0_15, %c0_16] : memref<4x128x128xbf16, #tpu.memory_space<vmem>>, vector<1x128x128xbf16>
    %23 = vector.shape_cast %22 : vector<1x128x128xbf16> to vector<128x128xbf16>
    %cst_17 = arith.constant dense<0.000000e+00> : vector<8x128xf32>
    %24 = tpu.matmul %21, %23, %cst_17 {dimension_numbers = #tpu.dot_dimension_numbers<[1], [0], [0], [1], [0, 0, 1, 1], [], []>} : vector<8x128xbf16>, vector<128x128xbf16>, vector<8x128xf32> -> vector<8x128xf32>
    %c0_18 = arith.constant 0 : index
    %c0_19 = arith.constant 0 : index
    %c0_20 = arith.constant 0 : index
    %25 = vector.load %arg6[%c0_18, %c0_19, %c0_20] : memref<4x1x128xbf16, #tpu.memory_space<vmem>>, vector<1x1x128xbf16>
    %26 = vector.shape_cast %25 : vector<1x1x128xbf16> to vector<1x128xbf16>
    %27 = arith.extf %26 : vector<1x128xbf16> to vector<1x128xf32>
    %28 = vector.broadcast %27 : vector<1x128xf32> to vector<8x128xf32>
    %29 = arith.addf %24, %28 : vector<8x128xf32>
    %cst_21 = arith.constant 0.000000e+00 : f32
    %30 = vector.broadcast %cst_21 : f32 to vector<8x128xf32>
    %31 = arith.maximumf %29, %30 : vector<8x128xf32>
    %32 = arith.truncf %31 : vector<8x128xf32> to vector<8x128xbf16>
    %c0_22 = arith.constant 0 : index
    %c0_23 = arith.constant 0 : index
    %c0_24 = arith.constant 0 : index
    %33 = vector.load %arg7[%c0_22, %c0_23, %c0_24] : memref<4x128x4xbf16, #tpu.memory_space<vmem>>, vector<1x128x4xbf16>
    %34 = vector.shape_cast %33 : vector<1x128x4xbf16> to vector<128x4xbf16>
    %cst_25 = arith.constant dense<0.000000e+00> : vector<8x4xf32>
    %35 = tpu.matmul %32, %34, %cst_25 {dimension_numbers = #tpu.dot_dimension_numbers<[1], [0], [0], [1], [0, 0, 1, 1], [], []>} : vector<8x128xbf16>, vector<128x4xbf16>, vector<8x4xf32> -> vector<8x4xf32>
    %c0_26 = arith.constant 0 : index
    %c0_27 = arith.constant 0 : index
    %c0_28 = arith.constant 0 : index
    %36 = vector.load %arg8[%c0_26, %c0_27, %c0_28] : memref<4x1x4xbf16, #tpu.memory_space<vmem>>, vector<1x1x4xbf16>
    %37 = vector.shape_cast %36 : vector<1x1x4xbf16> to vector<1x4xbf16>
    %38 = arith.extf %37 : vector<1x4xbf16> to vector<1x4xf32>
    %39 = vector.broadcast %38 : vector<1x4xf32> to vector<8x4xf32>
    %40 = arith.addf %35, %39 : vector<8x4xf32>
    %41 = vector.extract_strided_slice %8 {offsets = [0, 128], sizes = [8, 128], strides = [1, 1]} : vector<8x512xf32> to vector<8x128xf32>
    %42 = arith.truncf %41 : vector<8x128xf32> to vector<8x128xbf16>
    %c1 = arith.constant 1 : index
    %c0_29 = arith.constant 0 : index
    %c0_30 = arith.constant 0 : index
    %43 = vector.load %arg3[%c1, %c0_29, %c0_30] : memref<4x128x128xbf16, #tpu.memory_space<vmem>>, vector<1x128x128xbf16>
    %44 = vector.shape_cast %43 : vector<1x128x128xbf16> to vector<128x128xbf16>
    %cst_31 = arith.constant dense<0.000000e+00> : vector<8x128xf32>
    %45 = tpu.matmul %42, %44, %cst_31 {dimension_numbers = #tpu.dot_dimension_numbers<[1], [0], [0], [1], [0, 0, 1, 1], [], []>} : vector<8x128xbf16>, vector<128x128xbf16>, vector<8x128xf32> -> vector<8x128xf32>
    %c1_32 = arith.constant 1 : index
    %c0_33 = arith.constant 0 : index
    %c0_34 = arith.constant 0 : index
    %46 = vector.load %arg4[%c1_32, %c0_33, %c0_34] : memref<4x1x128xbf16, #tpu.memory_space<vmem>>, vector<1x1x128xbf16>
    %47 = vector.shape_cast %46 : vector<1x1x128xbf16> to vector<1x128xbf16>
    %48 = arith.extf %47 : vector<1x128xbf16> to vector<1x128xf32>
    %49 = vector.broadcast %48 : vector<1x128xf32> to vector<8x128xf32>
    %50 = arith.addf %45, %49 : vector<8x128xf32>
    %cst_35 = arith.constant 0.000000e+00 : f32
    %51 = vector.broadcast %cst_35 : f32 to vector<8x128xf32>
    %52 = arith.maximumf %50, %51 : vector<8x128xf32>
    %53 = arith.truncf %52 : vector<8x128xf32> to vector<8x128xbf16>
    %c1_36 = arith.constant 1 : index
    %c0_37 = arith.constant 0 : index
    %c0_38 = arith.constant 0 : index
    %54 = vector.load %arg5[%c1_36, %c0_37, %c0_38] : memref<4x128x128xbf16, #tpu.memory_space<vmem>>, vector<1x128x128xbf16>
    %55 = vector.shape_cast %54 : vector<1x128x128xbf16> to vector<128x128xbf16>
    %cst_39 = arith.constant dense<0.000000e+00> : vector<8x128xf32>
    %56 = tpu.matmul %53, %55, %cst_39 {dimension_numbers = #tpu.dot_dimension_numbers<[1], [0], [0], [1], [0, 0, 1, 1], [], []>} : vector<8x128xbf16>, vector<128x128xbf16>, vector<8x128xf32> -> vector<8x128xf32>
    %c1_40 = arith.constant 1 : index
    %c0_41 = arith.constant 0 : index
    %c0_42 = arith.constant 0 : index
    %57 = vector.load %arg6[%c1_40, %c0_41, %c0_42] : memref<4x1x128xbf16, #tpu.memory_space<vmem>>, vector<1x1x128xbf16>
    %58 = vector.shape_cast %57 : vector<1x1x128xbf16> to vector<1x128xbf16>
    %59 = arith.extf %58 : vector<1x128xbf16> to vector<1x128xf32>
    %60 = vector.broadcast %59 : vector<1x128xf32> to vector<8x128xf32>
    %61 = arith.addf %56, %60 : vector<8x128xf32>
    %cst_43 = arith.constant 0.000000e+00 : f32
    %62 = vector.broadcast %cst_43 : f32 to vector<8x128xf32>
    %63 = arith.maximumf %61, %62 : vector<8x128xf32>
    %64 = arith.truncf %63 : vector<8x128xf32> to vector<8x128xbf16>
    %c1_44 = arith.constant 1 : index
    %c0_45 = arith.constant 0 : index
    %c0_46 = arith.constant 0 : index
    %65 = vector.load %arg7[%c1_44, %c0_45, %c0_46] : memref<4x128x4xbf16, #tpu.memory_space<vmem>>, vector<1x128x4xbf16>
    %66 = vector.shape_cast %65 : vector<1x128x4xbf16> to vector<128x4xbf16>
    %cst_47 = arith.constant dense<0.000000e+00> : vector<8x4xf32>
    %67 = tpu.matmul %64, %66, %cst_47 {dimension_numbers = #tpu.dot_dimension_numbers<[1], [0], [0], [1], [0, 0, 1, 1], [], []>} : vector<8x128xbf16>, vector<128x4xbf16>, vector<8x4xf32> -> vector<8x4xf32>
    %c1_48 = arith.constant 1 : index
    %c0_49 = arith.constant 0 : index
    %c0_50 = arith.constant 0 : index
    %68 = vector.load %arg8[%c1_48, %c0_49, %c0_50] : memref<4x1x4xbf16, #tpu.memory_space<vmem>>, vector<1x1x4xbf16>
    %69 = vector.shape_cast %68 : vector<1x1x4xbf16> to vector<1x4xbf16>
    %70 = arith.extf %69 : vector<1x4xbf16> to vector<1x4xf32>
    %71 = vector.broadcast %70 : vector<1x4xf32> to vector<8x4xf32>
    %72 = arith.addf %67, %71 : vector<8x4xf32>
    %73 = vector.extract_strided_slice %8 {offsets = [0, 256], sizes = [8, 128], strides = [1, 1]} : vector<8x512xf32> to vector<8x128xf32>
    %74 = arith.truncf %73 : vector<8x128xf32> to vector<8x128xbf16>
    %c2 = arith.constant 2 : index
    %c0_51 = arith.constant 0 : index
    %c0_52 = arith.constant 0 : index
    %75 = vector.load %arg3[%c2, %c0_51, %c0_52] : memref<4x128x128xbf16, #tpu.memory_space<vmem>>, vector<1x128x128xbf16>
    %76 = vector.shape_cast %75 : vector<1x128x128xbf16> to vector<128x128xbf16>
    %cst_53 = arith.constant dense<0.000000e+00> : vector<8x128xf32>
    %77 = tpu.matmul %74, %76, %cst_53 {dimension_numbers = #tpu.dot_dimension_numbers<[1], [0], [0], [1], [0, 0, 1, 1], [], []>} : vector<8x128xbf16>, vector<128x128xbf16>, vector<8x128xf32> -> vector<8x128xf32>
    %c2_54 = arith.constant 2 : index
    %c0_55 = arith.constant 0 : index
    %c0_56 = arith.constant 0 : index
    %78 = vector.load %arg4[%c2_54, %c0_55, %c0_56] : memref<4x1x128xbf16, #tpu.memory_space<vmem>>, vector<1x1x128xbf16>
    %79 = vector.shape_cast %78 : vector<1x1x128xbf16> to vector<1x128xbf16>
    %80 = arith.extf %79 : vector<1x128xbf16> to vector<1x128xf32>
    %81 = vector.broadcast %80 : vector<1x128xf32> to vector<8x128xf32>
    %82 = arith.addf %77, %81 : vector<8x128xf32>
    %cst_57 = arith.constant 0.000000e+00 : f32
    %83 = vector.broadcast %cst_57 : f32 to vector<8x128xf32>
    %84 = arith.maximumf %82, %83 : vector<8x128xf32>
    %85 = arith.truncf %84 : vector<8x128xf32> to vector<8x128xbf16>
    %c2_58 = arith.constant 2 : index
    %c0_59 = arith.constant 0 : index
    %c0_60 = arith.constant 0 : index
    %86 = vector.load %arg5[%c2_58, %c0_59, %c0_60] : memref<4x128x128xbf16, #tpu.memory_space<vmem>>, vector<1x128x128xbf16>
    %87 = vector.shape_cast %86 : vector<1x128x128xbf16> to vector<128x128xbf16>
    %cst_61 = arith.constant dense<0.000000e+00> : vector<8x128xf32>
    %88 = tpu.matmul %85, %87, %cst_61 {dimension_numbers = #tpu.dot_dimension_numbers<[1], [0], [0], [1], [0, 0, 1, 1], [], []>} : vector<8x128xbf16>, vector<128x128xbf16>, vector<8x128xf32> -> vector<8x128xf32>
    %c2_62 = arith.constant 2 : index
    %c0_63 = arith.constant 0 : index
    %c0_64 = arith.constant 0 : index
    %89 = vector.load %arg6[%c2_62, %c0_63, %c0_64] : memref<4x1x128xbf16, #tpu.memory_space<vmem>>, vector<1x1x128xbf16>
    %90 = vector.shape_cast %89 : vector<1x1x128xbf16> to vector<1x128xbf16>
    %91 = arith.extf %90 : vector<1x128xbf16> to vector<1x128xf32>
    %92 = vector.broadcast %91 : vector<1x128xf32> to vector<8x128xf32>
    %93 = arith.addf %88, %92 : vector<8x128xf32>
    %cst_65 = arith.constant 0.000000e+00 : f32
    %94 = vector.broadcast %cst_65 : f32 to vector<8x128xf32>
    %95 = arith.maximumf %93, %94 : vector<8x128xf32>
    %96 = arith.truncf %95 : vector<8x128xf32> to vector<8x128xbf16>
    %c2_66 = arith.constant 2 : index
    %c0_67 = arith.constant 0 : index
    %c0_68 = arith.constant 0 : index
    %97 = vector.load %arg7[%c2_66, %c0_67, %c0_68] : memref<4x128x4xbf16, #tpu.memory_space<vmem>>, vector<1x128x4xbf16>
    %98 = vector.shape_cast %97 : vector<1x128x4xbf16> to vector<128x4xbf16>
    %cst_69 = arith.constant dense<0.000000e+00> : vector<8x4xf32>
    %99 = tpu.matmul %96, %98, %cst_69 {dimension_numbers = #tpu.dot_dimension_numbers<[1], [0], [0], [1], [0, 0, 1, 1], [], []>} : vector<8x128xbf16>, vector<128x4xbf16>, vector<8x4xf32> -> vector<8x4xf32>
    %c2_70 = arith.constant 2 : index
    %c0_71 = arith.constant 0 : index
    %c0_72 = arith.constant 0 : index
    %100 = vector.load %arg8[%c2_70, %c0_71, %c0_72] : memref<4x1x4xbf16, #tpu.memory_space<vmem>>, vector<1x1x4xbf16>
    %101 = vector.shape_cast %100 : vector<1x1x4xbf16> to vector<1x4xbf16>
    %102 = arith.extf %101 : vector<1x4xbf16> to vector<1x4xf32>
    %103 = vector.broadcast %102 : vector<1x4xf32> to vector<8x4xf32>
    %104 = arith.addf %99, %103 : vector<8x4xf32>
    %105 = vector.extract_strided_slice %8 {offsets = [0, 384], sizes = [8, 128], strides = [1, 1]} : vector<8x512xf32> to vector<8x128xf32>
    %106 = arith.truncf %105 : vector<8x128xf32> to vector<8x128xbf16>
    %c3 = arith.constant 3 : index
    %c0_73 = arith.constant 0 : index
    %c0_74 = arith.constant 0 : index
    %107 = vector.load %arg3[%c3, %c0_73, %c0_74] : memref<4x128x128xbf16, #tpu.memory_space<vmem>>, vector<1x128x128xbf16>
    %108 = vector.shape_cast %107 : vector<1x128x128xbf16> to vector<128x128xbf16>
    %cst_75 = arith.constant dense<0.000000e+00> : vector<8x128xf32>
    %109 = tpu.matmul %106, %108, %cst_75 {dimension_numbers = #tpu.dot_dimension_numbers<[1], [0], [0], [1], [0, 0, 1, 1], [], []>} : vector<8x128xbf16>, vector<128x128xbf16>, vector<8x128xf32> -> vector<8x128xf32>
    %c3_76 = arith.constant 3 : index
    %c0_77 = arith.constant 0 : index
    %c0_78 = arith.constant 0 : index
    %110 = vector.load %arg4[%c3_76, %c0_77, %c0_78] : memref<4x1x128xbf16, #tpu.memory_space<vmem>>, vector<1x1x128xbf16>
    %111 = vector.shape_cast %110 : vector<1x1x128xbf16> to vector<1x128xbf16>
    %112 = arith.extf %111 : vector<1x128xbf16> to vector<1x128xf32>
    %113 = vector.broadcast %112 : vector<1x128xf32> to vector<8x128xf32>
    %114 = arith.addf %109, %113 : vector<8x128xf32>
    %cst_79 = arith.constant 0.000000e+00 : f32
    %115 = vector.broadcast %cst_79 : f32 to vector<8x128xf32>
    %116 = arith.maximumf %114, %115 : vector<8x128xf32>
    %117 = arith.truncf %116 : vector<8x128xf32> to vector<8x128xbf16>
    %c3_80 = arith.constant 3 : index
    %c0_81 = arith.constant 0 : index
    %c0_82 = arith.constant 0 : index
    %118 = vector.load %arg5[%c3_80, %c0_81, %c0_82] : memref<4x128x128xbf16, #tpu.memory_space<vmem>>, vector<1x128x128xbf16>
    %119 = vector.shape_cast %118 : vector<1x128x128xbf16> to vector<128x128xbf16>
    %cst_83 = arith.constant dense<0.000000e+00> : vector<8x128xf32>
    %120 = tpu.matmul %117, %119, %cst_83 {dimension_numbers = #tpu.dot_dimension_numbers<[1], [0], [0], [1], [0, 0, 1, 1], [], []>} : vector<8x128xbf16>, vector<128x128xbf16>, vector<8x128xf32> -> vector<8x128xf32>
    %c3_84 = arith.constant 3 : index
    %c0_85 = arith.constant 0 : index
    %c0_86 = arith.constant 0 : index
    %121 = vector.load %arg6[%c3_84, %c0_85, %c0_86] : memref<4x1x128xbf16, #tpu.memory_space<vmem>>, vector<1x1x128xbf16>
    %122 = vector.shape_cast %121 : vector<1x1x128xbf16> to vector<1x128xbf16>
    %123 = arith.extf %122 : vector<1x128xbf16> to vector<1x128xf32>
    %124 = vector.broadcast %123 : vector<1x128xf32> to vector<8x128xf32>
    %125 = arith.addf %120, %124 : vector<8x128xf32>
    %cst_87 = arith.constant 0.000000e+00 : f32
    %126 = vector.broadcast %cst_87 : f32 to vector<8x128xf32>
    %127 = arith.maximumf %125, %126 : vector<8x128xf32>
    %128 = arith.truncf %127 : vector<8x128xf32> to vector<8x128xbf16>
    %c3_88 = arith.constant 3 : index
    %c0_89 = arith.constant 0 : index
    %c0_90 = arith.constant 0 : index
    %129 = vector.load %arg7[%c3_88, %c0_89, %c0_90] : memref<4x128x4xbf16, #tpu.memory_space<vmem>>, vector<1x128x4xbf16>
    %130 = vector.shape_cast %129 : vector<1x128x4xbf16> to vector<128x4xbf16>
    %cst_91 = arith.constant dense<0.000000e+00> : vector<8x4xf32>
    %131 = tpu.matmul %128, %130, %cst_91 {dimension_numbers = #tpu.dot_dimension_numbers<[1], [0], [0], [1], [0, 0, 1, 1], [], []>} : vector<8x128xbf16>, vector<128x4xbf16>, vector<8x4xf32> -> vector<8x4xf32>
    %c3_92 = arith.constant 3 : index
    %c0_93 = arith.constant 0 : index
    %c0_94 = arith.constant 0 : index
    %132 = vector.load %arg8[%c3_92, %c0_93, %c0_94] : memref<4x1x4xbf16, #tpu.memory_space<vmem>>, vector<1x1x4xbf16>
    %133 = vector.shape_cast %132 : vector<1x1x4xbf16> to vector<1x4xbf16>
    %134 = arith.extf %133 : vector<1x4xbf16> to vector<1x4xf32>
    %135 = vector.broadcast %134 : vector<1x4xf32> to vector<8x4xf32>
    %136 = arith.addf %131, %135 : vector<8x4xf32>
    %137 = arith.addf %40, %72 : vector<8x4xf32>
    %138 = arith.addf %137, %104 : vector<8x4xf32>
    %139 = arith.addf %138, %136 : vector<8x4xf32>
    %cst_95 = arith.constant 2.500000e-01 : f32
    %140 = vector.broadcast %cst_95 : f32 to vector<8x4xf32>
    %141 = arith.mulf %139, %140 : vector<8x4xf32>
    %142 = arith.subf %40, %141 : vector<8x4xf32>
    %143 = arith.mulf %142, %142 : vector<8x4xf32>
    %144 = arith.subf %72, %141 : vector<8x4xf32>
    %145 = arith.mulf %144, %144 : vector<8x4xf32>
    %146 = arith.addf %143, %145 : vector<8x4xf32>
    %147 = arith.subf %104, %141 : vector<8x4xf32>
    %148 = arith.mulf %147, %147 : vector<8x4xf32>
    %149 = arith.addf %146, %148 : vector<8x4xf32>
    %150 = arith.subf %136, %141 : vector<8x4xf32>
    %151 = arith.mulf %150, %150 : vector<8x4xf32>
    %152 = arith.addf %149, %151 : vector<8x4xf32>
    %cst_96 = arith.constant 0.333333343 : f32
    %153 = vector.broadcast %cst_96 : f32 to vector<8x4xf32>
    %154 = arith.mulf %152, %153 : vector<8x4xf32>
    %c0_97 = arith.constant 0 : index
    %c0_98 = arith.constant 0 : index
    %155 = vector.load %arg9[%c0_97, %c0_98] : memref<8x4xf32, #tpu.memory_space<vmem>>, vector<8x4xf32>
    tpu.vector_store %arg9[%c0_97, %c0_98], %141 {strides = array<i32>} : memref<8x4xf32, #tpu.memory_space<vmem>>, vector<8x4xf32>,
    %156 = math.log %154 : vector<8x4xf32>
    %c0_99 = arith.constant 0 : index
    %c0_100 = arith.constant 0 : index
    %157 = vector.load %arg10[%c0_99, %c0_100] : memref<8x4xf32, #tpu.memory_space<vmem>>, vector<8x4xf32>
    tpu.vector_store %arg10[%c0_99, %c0_100], %156 {strides = array<i32>} : memref<8x4xf32, #tpu.memory_space<vmem>>, vector<8x4xf32>,
    return
  }
}

</mosaic_0001>

<llo_original>
// kernel: bnn_ensemble_forward.1
$region0: #{bnn_ensemble_forward.1}
  #allocation0 [shape = 'u32[]', space=smem, size = 0x4, offset = 0x4, fixed_abs, tag = 'smem constant byte address 0x4 - core index']
  #allocation1 [shape = 'u32[72,128]{1,0:T(1,128)}', space=vmem, size = 0x9000, scoped, tag = 'internal scratch']
  %s0 = inlined_call_operand.vmem [shape: bf16[8,4], index: 0, kind: input, shape index: {}]
  %s1 = inlined_call_operand.vmem [shape: bf16[4,512], index: 1, kind: input, shape index: {}]
  %s2 = inlined_call_operand.vmem [shape: bf16[1,512], index: 2, kind: input, shape index: {}]
  %s3 = inlined_call_operand.vmem [shape: bf16[4,128,128], index: 3, kind: input, shape index: {}]
  %s4 = inlined_call_operand.vmem [shape: bf16[4,1,128], index: 4, kind: input, shape index: {}]
  %s5 = inlined_call_operand.hbm [shape: bf16[4,128,128], index: 5, kind: input, shape index: {}]
  %s6 = inlined_call_operand.vmem [shape: bf16[4,1,128], index: 6, kind: input, shape index: {}]
  %s7 = inlined_call_operand.vmem [shape: bf16[4,128,4], index: 7, kind: input, shape index: {}]
  %s8 = inlined_call_operand.vmem [shape: bf16[4,1,4], index: 8, kind: input, shape index: {}]
  %s9 = inlined_call_operand.vmem [shape: f32[8,4], index: 9, kind: output, shape index: {0}]
  %s10 = inlined_call_operand.vmem [shape: f32[8,4], index: 10, kind: output, shape index: {1}]
  %11 = xla_tuple %s9, %s10
  %s12 = sld [smem:[#allocation0]]
  $region58: #{bnn_ensemble_forward.1} parent=0
    _
  %s14 = ssub.s32 1, %s12
  %s15 = scalar_select 0, %s14, %s12
  $region1: #{bnn_ensemble_forward.1} parent=0
    #allocation2 [shape = 'u8[131072]{0}', space=vmem, size = 0x20000, scoped, tag = 'input window, operand 5, single buffered']
    #allocation3 [shape = 's32[1]{0}', space=sflag, size = 0x4, scoped, tag = 'scoped memory for bnn_ensemble_forward.1']
    %16 = vsyncpa [#allocation3], 0
    // Predicated region
    $region2: #{bnn_ensemble_forward.1} parent=1 // pred_check
      _
    $region3: #{bnn_ensemble_forward.1} parent=1 // pred_check_branch
      %18 = sbr.rel (0) target = $region5
    $region4: #{bnn_ensemble_forward.1} parent=1 // pred_region
      _
    $region5: #{bnn_ensemble_forward.1} parent=1 // pred_fallthru
      _
    // Predicated region
    $region6: #{bnn_ensemble_forward.1} parent=1 // pred_check
      _
    $region7: #{bnn_ensemble_forward.1} parent=1 // pred_check_branch
      %20 = sbr.rel (0) target = $region9
    $region8: #{bnn_ensemble_forward.1} parent=1 // pred_region
      _
    $region9: #{bnn_ensemble_forward.1} parent=1 // pred_fallthru
      _
    // Predicated region
    $region10: #{bnn_ensemble_forward.1} parent=1 // pred_check
      _
    $region11: #{bnn_ensemble_forward.1} parent=1 // pred_check_branch
      %22 = sbr.rel (0) target = $region13
    $region12: #{bnn_ensemble_forward.1} parent=1 // pred_region
      _
    $region13: #{bnn_ensemble_forward.1} parent=1 // pred_fallthru
      _
    // Predicated region
    $region14: #{bnn_ensemble_forward.1} parent=1 // pred_check
      _
    $region15: #{bnn_ensemble_forward.1} parent=1 // pred_check_branch
      %24 = sbr.rel (0) target = $region17
    $region16: #{bnn_ensemble_forward.1} parent=1 // pred_region
      _
    $region17: #{bnn_ensemble_forward.1} parent=1 // pred_fallthru
      _
    // Predicated region
    $region18: #{bnn_ensemble_forward.1} parent=1 // pred_check
      _
    $region19: #{bnn_ensemble_forward.1} parent=1 // pred_check_branch
      %26 = sbr.rel (0) target = $region21
    $region20: #{bnn_ensemble_forward.1} parent=1 // pred_region
      _
    $region21: #{bnn_ensemble_forward.1} parent=1 // pred_fallthru
      _
    // Predicated region
    $region22: #{bnn_ensemble_forward.1} parent=1 // pred_check
      _
    $region23: #{bnn_ensemble_forward.1} parent=1 // pred_check_branch
      %28 = sbr.rel (0) target = $region25
    $region24: #{bnn_ensemble_forward.1} parent=1 // pred_region
      %30 = vsyncadd [#allocation3], 0
      %s31 = sshll.u32 %s5, 4
      %s32 = int_to_ptr.hbm [resolvable:$true] %s31
      %s33 = sshll.u32 [#allocation2], 4
      %s34 = int_to_ptr.vmem [resolvable:$true] %s33
      %39 = dma.hbm_to_vmem [thread:$0]  %s32, 4096, %s34, [#allocation3], 64, 64, 4
    $region25: #{bnn_ensemble_forward.1} parent=1 // pred_fallthru
      _
    // Predicated region
    $region26: #{bnn_ensemble_forward.1} parent=1 // pred_check
      _
    $region27: #{bnn_ensemble_forward.1} parent=1 // pred_check_branch
      %41 = sbr.rel (0) target = $region29
    $region28: #{bnn_ensemble_forward.1} parent=1 // pred_region
      _
    $region29: #{bnn_ensemble_forward.1} parent=1 // pred_fallthru
      _
    // Predicated region
    $region30: #{bnn_ensemble_forward.1} parent=1 // pred_check
      _
    $region31: #{bnn_ensemble_forward.1} parent=1 // pred_check_branch
      %43 = sbr.rel (0) target = $region33
    $region32: #{bnn_ensemble_forward.1} parent=1 // pred_region
      _
    $region33: #{bnn_ensemble_forward.1} parent=1 // pred_fallthru
      _
    // Predicated region
    $region34: #{bnn_ensemble_forward.1} parent=1 // pred_check
      _
    $region35: #{bnn_ensemble_forward.1} parent=1 // pred_check_branch
      %45 = sbr.rel (0) target = $region37
    $region36: #{bnn_ensemble_forward.1} parent=1 // pred_region
      _
    $region37: #{bnn_ensemble_forward.1} parent=1 // pred_fallthru
      _
    // Predicated region
    $region38: #{bnn_ensemble_forward.1} parent=1 // pred_check
      _
    $region39: #{bnn_ensemble_forward.1} parent=1 // pred_check_branch
      %47 = sbr.rel (0) target = $region41
    $region40: #{bnn_ensemble_forward.1} parent=1 // pred_region
      %49 = dma.done [#allocation3], 4096
    $region41: #{bnn_ensemble_forward.1} parent=1 // pred_fallthru
      _
    %v51 = vld [vmem:[%s0] sm:$0xf]
    %v52 = vld [vmem:[%s1] sm:$0xff]
    %v53 = vld [vmem:[%s2] sm:$0xf]
    %v54 = vunpack.c.l.bf16 %v53
    %v56 = vperm.slane %v54, 0
    %v57 = vperm.slane %v54, 2
    %v58 = vperm.slane %v54, 4
    %v59 = vperm.slane %v54, 6
    %v64 = vperm.slane %v56, 0
    %v65 = vperm.slane %v57, 0
    %v66 = vperm.slane %v58, 0
    %v67 = vperm.slane %v59, 0
    %69 = vst [vmem:[#allocation1] ss:$4 sm:$0xff] %v52
    %v70 = vld.sshfl [vmem:[#allocation1] sm:$0xff pattern:$0x73625140]
    %v71 = vld.sshfl [vmem:[#allocation1 + $0x8] sm:$0xff pattern:$0x73625140]
    %v72 = vld.sshfl [vmem:[#allocation1 + $0x10] sm:$0xff pattern:$0x73625140]
    %v73 = vld.sshfl [vmem:[#allocation1 + $0x18] sm:$0xff pattern:$0x73625140]
    %vm74 = vcmask 31744
    %v76 = vsel %vm74, %v51, 0
    %vm78 = vcmask 1041408
    %v79 = vsel %vm78, %v70, 0
    %v81 = vsel %vm78, %v71, 0
    %v83 = vsel %vm78, %v72, 0
    %v85 = vsel %vm78, %v73, 0
    %87 = vmatpush.bf16.msra.mxu0 0
    %88 = vmatpush.bf16.msra.mxu0 0
    %89 = vmatpush.bf16.msra.mxu0 0
    %90 = vmatpush.bf16.msra.mxu0 0
    %91 = vmatpush.bf16.msra.mxu0 0
    %92 = vmatpush.bf16.msra.mxu0 0
    %93 = vmatpush.bf16.msra.mxu0 0
    %94 = vmatpush.bf16.msra.mxu0 %v79
    %95 = vmatmul.bf16.gmra.mxu0 %v76
    %v96 = vpop.f32.mrf.mxu0
    %v97 = vadd.f32 %v64, %v96
    %v98 = vpop.f32.mrf.mxu0
    %99 = vdwg.mxu0
    %100 = vmatpush.bf16.msra.mxu0 0
    %101 = vmatpush.bf16.msra.mxu0 0
    %102 = vmatpush.bf16.msra.mxu0 0
    %103 = vmatpush.bf16.msra.mxu0 0
    %104 = vmatpush.bf16.msra.mxu0 0
    %105 = vmatpush.bf16.msra.mxu0 0
    %106 = vmatpush.bf16.msra.mxu0 0
    %107 = vmatpush.bf16.msra.mxu0 %v81
    %108 = vmatmul.bf16.gmra.mxu0 %v76
    %v109 = vpop.f32.mrf.mxu0
    %v110 = vadd.f32 %v65, %v109
    %v111 = vpop.f32.mrf.mxu0
    %112 = vdwg.mxu0
    %113 = vmatpush.bf16.msra.mxu0 0
    %114 = vmatpush.bf16.msra.mxu0 0
    %115 = vmatpush.bf16.msra.mxu0 0
    %116 = vmatpush.bf16.msra.mxu0 0
    %117 = vmatpush.bf16.msra.mxu0 0
    %118 = vmatpush.bf16.msra.mxu0 0
    %119 = vmatpush.bf16.msra.mxu0 0
    %120 = vmatpush.bf16.msra.mxu0 %v83
    %121 = vmatmul.bf16.gmra.mxu0 %v76
    %v122 = vpop.f32.mrf.mxu0
    %v123 = vadd.f32 %v66, %v122
    %v124 = vpop.f32.mrf.mxu0
    %125 = vdwg.mxu0
    %126 = vmatpush.bf16.msra.mxu0 0
    %127 = vmatpush.bf16.msra.mxu0 0
    %128 = vmatpush.bf16.msra.mxu0 0
    %129 = vmatpush.bf16.msra.mxu0 0
    %130 = vmatpush.bf16.msra.mxu0 0
    %131 = vmatpush.bf16.msra.mxu0 0
    %132 = vmatpush.bf16.msra.mxu0 0
    %133 = vmatpush.bf16.msra.mxu0 %v85
    %134 = vmatmul.bf16.gmra.mxu0 %v76
    %v135 = vpop.f32.mrf.mxu0
    %v136 = vadd.f32 %v67, %v135
    %v137 = vpop.f32.mrf.mxu0
    %138 = vdwg.mxu0
    %v139 = vmax.f32 %v97, 0.0
    %v140 = vmax.f32 %v110, 0.0
    %v141 = vmax.f32 %v123, 0.0
    %v142 = vmax.f32 %v136, 0.0
    %v143 = vpack.c.bf16 %v139, %v139
    %v144 = vld [vmem:[%s3] sm:$0xf]
    %v145 = vld [vmem:[%s3 + $0x4] sm:$0xf]
    %v146 = vld [vmem:[%s3 + $0x8] sm:$0xf]
    %v147 = vld [vmem:[%s3 + $0xc] sm:$0xf]
    %v148 = vld [vmem:[%s3 + $0x10] sm:$0xf]
    %v149 = vld [vmem:[%s3 + $0x14] sm:$0xf]
    %v150 = vld [vmem:[%s3 + $0x18] sm:$0xf]
    %v151 = vld [vmem:[%s3 + $0x1c] sm:$0xf]
    %v152 = vld [vmem:[%s3 + $0x20] sm:$0xf]
    %v153 = vld [vmem:[%s3 + $0x24] sm:$0xf]
    %v154 = vld [vmem:[%s3 + $0x28] sm:$0xf]
    %v155 = vld [vmem:[%s3 + $0x2c] sm:$0xf]
    %v156 = vld [vmem:[%s3 + $0x30] sm:$0xf]
    %v157 = vld [vmem:[%s3 + $0x34] sm:$0xf]
    %v158 = vld [vmem:[%s3 + $0x38] sm:$0xf]
    %v159 = vld [vmem:[%s3 + $0x3c] sm:$0xf]
    %v160 = vld [vmem:[%s4] sm:$0x1]
    %v161 = vunpack.c.l.bf16 %v160
    %v162 = vperm.slane %v161, 0
    %v179 = vunpack.c.l.b16 %v144
    %v180 = vunpack.c.l.b16 %v145
    %v181 = vunpack.c.l.b16 %v146
    %v182 = vunpack.c.l.b16 %v147
    %v183 = vunpack.c.l.b16 %v148
    %v184 = vunpack.c.l.b16 %v149
    %v185 = vunpack.c.l.b16 %v150
    %v186 = vunpack.c.l.b16 %v151
    %v187 = vunpack.c.l.b16 %v152
    %v188 = vunpack.c.l.b16 %v153
    %v189 = vunpack.c.l.b16 %v154
    %v190 = vunpack.c.l.b16 %v155
    %v191 = vunpack.c.l.b16 %v156
    %v192 = vunpack.c.l.b16 %v157
    %v193 = vunpack.c.l.b16 %v158
    %v194 = vunpack.c.l.b16 %v159
    %v195 = vpack.c.b16 %v180, %v179
    %v196 = vpack.c.b16 %v182, %v181
    %v197 = vpack.c.b16 %v184, %v183
    %v198 = vpack.c.b16 %v186, %v185
    %v199 = vpack.c.b16 %v188, %v187
    %v200 = vpack.c.b16 %v190, %v189
    %v201 = vpack.c.b16 %v192, %v191
    %v202 = vpack.c.b16 %v194, %v193
    %211 = vmatpush.bf16.msra.mxu0 %v202
    %212 = vmatpush.bf16.msra.mxu0 %v201
    %213 = vmatpush.bf16.msra.mxu0 %v200
    %214 = vmatpush.bf16.msra.mxu0 %v199
    %215 = vmatpush.bf16.msra.mxu0 %v198
    %216 = vmatpush.bf16.msra.mxu0 %v197
    %217 = vmatpush.bf16.msra.mxu0 %v196
    %218 = vmatpush.bf16.msra.mxu0 %v195
    %219 = vmatmul.bf16.gmra.mxu0 %v143
    %v220 = vpop.f32.mrf.mxu0
    %v221 = vadd.f32 %v162, %v220
    %v222 = vpop.f32.mrf.mxu0
    %223 = vdwg.mxu0
    %v224 = vmax.f32 %v221, 0.0
    %v225 = vpack.c.bf16 %v224, %v224
    %v226 = vld [vmem:[#allocation2] sm:$0xf]
    %v227 = vld [vmem:[#allocation2 + $0x4] sm:$0xf]
    %v228 = vld [vmem:[#allocation2 + $0x8] sm:$0xf]
    %v229 = vld [vmem:[#allocation2 + $0xc] sm:$0xf]
    %v230 = vld [vmem:[#allocation2 + $0x10] sm:$0xf]
    %v231 = vld [vmem:[#allocation2 + $0x14] sm:$0xf]
    %v232 = vld [vmem:[#allocation2 + $0x18] sm:$0xf]
    %v233 = vld [vmem:[#allocation2 + $0x1c] sm:$0xf]
    %v234 = vld [vmem:[#allocation2 + $0x20] sm:$0xf]
    %v235 = vld [vmem:[#allocation2 + $0x24] sm:$0xf]
    %v236 = vld [vmem:[#allocation2 + $0x28] sm:$0xf]
    %v237 = vld [vmem:[#allocation2 + $0x2c] sm:$0xf]
    %v238 = vld [vmem:[#allocation2 + $0x30] sm:$0xf]
    %v239 = vld [vmem:[#allocation2 + $0x34] sm:$0xf]
    %v240 = vld [vmem:[#allocation2 + $0x38] sm:$0xf]
    %v241 = vld [vmem:[#allocation2 + $0x3c] sm:$0xf]
    %v242 = vld [vmem:[%s6] sm:$0x1]
    %v243 = vunpack.c.l.bf16 %v242
    %v244 = vperm.slane %v243, 0
    %v261 = vunpack.c.l.b16 %v226
    %v262 = vunpack.c.l.b16 %v227
    %v263 = vunpack.c.l.b16 %v228
    %v264 = vunpack.c.l.b16 %v229
    %v265 = vunpack.c.l.b16 %v230
    %v266 = vunpack.c.l.b16 %v231
    %v267 = vunpack.c.l.b16 %v232
    %v268 = vunpack.c.l.b16 %v233
    %v269 = vunpack.c.l.b16 %v234
    %v270 = vunpack.c.l.b16 %v235
    %v271 = vunpack.c.l.b16 %v236
    %v272 = vunpack.c.l.b16 %v237
    %v273 = vunpack.c.l.b16 %v238
    %v274 = vunpack.c.l.b16 %v239
    %v275 = vunpack.c.l.b16 %v240
    %v276 = vunpack.c.l.b16 %v241
    %v277 = vpack.c.b16 %v262, %v261
    %v278 = vpack.c.b16 %v264, %v263
    %v279 = vpack.c.b16 %v266, %v265
    %v280 = vpack.c.b16 %v268, %v267
    %v281 = vpack.c.b16 %v270, %v269
    %v282 = vpack.c.b16 %v272, %v271
    %v283 = vpack.c.b16 %v274, %v273
    %v284 = vpack.c.b16 %v276, %v275
    %293 = vmatpush.bf16.msra.mxu0 %v284
    %294 = vmatpush.bf16.msra.mxu0 %v283
    %295 = vmatpush.bf16.msra.mxu0 %v282
    %296 = vmatpush.bf16.msra.mxu0 %v281
    %297 = vmatpush.bf16.msra.mxu0 %v280
    %298 = vmatpush.bf16.msra.mxu0 %v279
    %299 = vmatpush.bf16.msra.mxu0 %v278
    %300 = vmatpush.bf16.msra.mxu0 %v277
    %301 = vmatmul.bf16.gmra.mxu0 %v225
    %v302 = vpop.f32.mrf.mxu0
    %v303 = vadd.f32 %v244, %v302
    %v304 = vpop.f32.mrf.mxu0
    %305 = vdwg.mxu0
    %v306 = vmax.f32 %v303, 0.0
    %v307 = vpack.c.bf16 %v306, %v306
    %v308 = vld [vmem:[%s7] sm:$0xf]
    %v309 = vld [vmem:[%s7 + $0x4] sm:$0xf]
    %v310 = vld [vmem:[%s7 + $0x8] sm:$0xf]
    %v311 = vld [vmem:[%s7 + $0xc] sm:$0xf]
    %v312 = vld [vmem:[%s7 + $0x10] sm:$0xf]
    %v313 = vld [vmem:[%s7 + $0x14] sm:$0xf]
    %v314 = vld [vmem:[%s7 + $0x18] sm:$0xf]
    %v315 = vld [vmem:[%s7 + $0x1c] sm:$0xf]
    %v316 = vld [vmem:[%s7 + $0x20] sm:$0xf]
    %v317 = vld [vmem:[%s7 + $0x24] sm:$0xf]
    %v318 = vld [vmem:[%s7 + $0x28] sm:$0xf]
    %v319 = vld [vmem:[%s7 + $0x2c] sm:$0xf]
    %v320 = vld [vmem:[%s7 + $0x30] sm:$0xf]
    %v321 = vld [vmem:[%s7 + $0x34] sm:$0xf]
    %v322 = vld [vmem:[%s7 + $0x38] sm:$0xf]
    %v323 = vld [vmem:[%s7 + $0x3c] sm:$0xf]
    %v324 = vld [vmem:[%s8] sm:$0x1]
    %v325 = vunpack.c.l.bf16 %v324
    %v326 = vperm.slane %v325, 0
    %v343 = vunpack.c.l.b16 %v308
    %v344 = vunpack.c.l.b16 %v309
    %v345 = vunpack.c.l.b16 %v310
    %v346 = vunpack.c.l.b16 %v311
    %v347 = vunpack.c.l.b16 %v312
    %v348 = vunpack.c.l.b16 %v313
    %v349 = vunpack.c.l.b16 %v314
    %v350 = vunpack.c.l.b16 %v315
    %v351 = vunpack.c.l.b16 %v316
    %v352 = vunpack.c.l.b16 %v317
    %v353 = vunpack.c.l.b16 %v318
    %v354 = vunpack.c.l.b16 %v319
    %v355 = vunpack.c.l.b16 %v320
    %v356 = vunpack.c.l.b16 %v321
    %v357 = vunpack.c.l.b16 %v322
    %v358 = vunpack.c.l.b16 %v323
    %v359 = vpack.c.b16 %v344, %v343
    %v360 = vpack.c.b16 %v346, %v345
    %v361 = vpack.c.b16 %v348, %v347
    %v362 = vpack.c.b16 %v350, %v349
    %v363 = vpack.c.b16 %v352, %v351
    %v364 = vpack.c.b16 %v354, %v353
    %v365 = vpack.c.b16 %v356, %v355
    %v366 = vpack.c.b16 %v358, %v357
    %375 = vmatpush.bf16.msra.mxu0 %v366
    %376 = vmatpush.bf16.msra.mxu0 %v365
    %377 = vmatpush.bf16.msra.mxu0 %v364
    %378 = vmatpush.bf16.msra.mxu0 %v363
    %379 = vmatpush.bf16.msra.mxu0 %v362
    %380 = vmatpush.bf16.msra.mxu0 %v361
    %381 = vmatpush.bf16.msra.mxu0 %v360
    %382 = vmatpush.bf16.msra.mxu0 %v359
    %383 = vmatmul.bf16.gmra.mxu0 %v307
    %v384 = vpop.f32.mrf.mxu0
    %v385 = vadd.f32 %v326, %v384
    %v386 = vpop.f32.mrf.mxu0
    %387 = vdwg.mxu0
    %v388 = vpack.c.bf16 %v140, %v140
    %s389 = scalar_lea.vmem %s3, 64
    %v390 = vld [vmem:[%s389] sm:$0xf]
    %v391 = vld [vmem:[%s389 + $0x4] sm:$0xf]
    %v392 = vld [vmem:[%s389 + $0x8] sm:$0xf]
    %v393 = vld [vmem:[%s389 + $0xc] sm:$0xf]
    %v394 = vld [vmem:[%s389 + $0x10] sm:$0xf]
    %v395 = vld [vmem:[%s389 + $0x14] sm:$0xf]
    %v396 = vld [vmem:[%s389 + $0x18] sm:$0xf]
    %v397 = vld [vmem:[%s389 + $0x1c] sm:$0xf]
    %v398 = vld [vmem:[%s389 + $0x20] sm:$0xf]
    %v399 = vld [vmem:[%s389 + $0x24] sm:$0xf]
    %v400 = vld [vmem:[%s389 + $0x28] sm:$0xf]
    %v401 = vld [vmem:[%s389 + $0x2c] sm:$0xf]
    %v402 = vld [vmem:[%s389 + $0x30] sm:$0xf]
    %v403 = vld [vmem:[%s389 + $0x34] sm:$0xf]
    %v404 = vld [vmem:[%s389 + $0x38] sm:$0xf]
    %v405 = vld [vmem:[%s389 + $0x3c] sm:$0xf]
    %s406 = scalar_lea.vmem %s4, 1
    %v407 = vld [vmem:[%s406] sm:$0x1]
    %v408 = vunpack.c.l.bf16 %v407
    %v409 = vperm.slane %v408, 0
    %v426 = vunpack.c.l.b16 %v390
    %v427 = vunpack.c.l.b16 %v391
    %v428 = vunpack.c.l.b16 %v392
    %v429 = vunpack.c.l.b16 %v393
    %v430 = vunpack.c.l.b16 %v394
    %v431 = vunpack.c.l.b16 %v395
    %v432 = vunpack.c.l.b16 %v396
    %v433 = vunpack.c.l.b16 %v397
    %v434 = vunpack.c.l.b16 %v398
    %v435 = vunpack.c.l.b16 %v399
    %v436 = vunpack.c.l.b16 %v400
    %v437 = vunpack.c.l.b16 %v401
    %v438 = vunpack.c.l.b16 %v402
    %v439 = vunpack.c.l.b16 %v403
    %v440 = vunpack.c.l.b16 %v404
    %v441 = vunpack.c.l.b16 %v405
    %v442 = vpack.c.b16 %v427, %v426
    %v443 = vpack.c.b16 %v429, %v428
    %v444 = vpack.c.b16 %v431, %v430
    %v445 = vpack.c.b16 %v433, %v432
    %v446 = vpack.c.b16 %v435, %v434
    %v447 = vpack.c.b16 %v437, %v436
    %v448 = vpack.c.b16 %v439, %v438
    %v449 = vpack.c.b16 %v441, %v440
    %458 = vmatpush.bf16.msra.mxu0 %v449
    %459 = vmatpush.bf16.msra.mxu0 %v448
    %460 = vmatpush.bf16.msra.mxu0 %v447
    %461 = vmatpush.bf16.msra.mxu0 %v446
    %462 = vmatpush.bf16.msra.mxu0 %v445
    %463 = vmatpush.bf16.msra.mxu0 %v444
    %464 = vmatpush.bf16.msra.mxu0 %v443
    %465 = vmatpush.bf16.msra.mxu0 %v442
    %466 = vmatmul.bf16.gmra.mxu0 %v388
    %v467 = vpop.f32.mrf.mxu0
    %v468 = vadd.f32 %v409, %v467
    %v469 = vpop.f32.mrf.mxu0
    %470 = vdwg.mxu0
    %v471 = vmax.f32 %v468, 0.0
    %v472 = vpack.c.bf16 %v471, %v471
    %s473 = scalar_lea.vmem [#allocation2], 64
    %v474 = vld [vmem:[%s473] sm:$0xf]
    %v475 = vld [vmem:[%s473 + $0x4] sm:$0xf]
    %v476 = vld [vmem:[%s473 + $0x8] sm:$0xf]
    %v477 = vld [vmem:[%s473 + $0xc] sm:$0xf]
    %v478 = vld [vmem:[%s473 + $0x10] sm:$0xf]
    %v479 = vld [vmem:[%s473 + $0x14] sm:$0xf]
    %v480 = vld [vmem:[%s473 + $0x18] sm:$0xf]
    %v481 = vld [vmem:[%s473 + $0x1c] sm:$0xf]
    %v482 = vld [vmem:[%s473 + $0x20] sm:$0xf]
    %v483 = vld [vmem:[%s473 + $0x24] sm:$0xf]
    %v484 = vld [vmem:[%s473 + $0x28] sm:$0xf]
    %v485 = vld [vmem:[%s473 + $0x2c] sm:$0xf]
    %v486 = vld [vmem:[%s473 + $0x30] sm:$0xf]
    %v487 = vld [vmem:[%s473 + $0x34] sm:$0xf]
    %v488 = vld [vmem:[%s473 + $0x38] sm:$0xf]
    %v489 = vld [vmem:[%s473 + $0x3c] sm:$0xf]
    %s490 = scalar_lea.vmem %s6, 1
    %v491 = vld [vmem:[%s490] sm:$0x1]
    %v492 = vunpack.c.l.bf16 %v491
    %v493 = vperm.slane %v492, 0
    %v510 = vunpack.c.l.b16 %v474
    %v511 = vunpack.c.l.b16 %v475
    %v512 = vunpack.c.l.b16 %v476
    %v513 = vunpack.c.l.b16 %v477
    %v514 = vunpack.c.l.b16 %v478
    %v515 = vunpack.c.l.b16 %v479
    %v516 = vunpack.c.l.b16 %v480
    %v517 = vunpack.c.l.b16 %v481
    %v518 = vunpack.c.l.b16 %v482
    %v519 = vunpack.c.l.b16 %v483
    %v520 = vunpack.c.l.b16 %v484
    %v521 = vunpack.c.l.b16 %v485
    %v522 = vunpack.c.l.b16 %v486
    %v523 = vunpack.c.l.b16 %v487
    %v524 = vunpack.c.l.b16 %v488
    %v525 = vunpack.c.l.b16 %v489
    %v526 = vpack.c.b16 %v511, %v510
    %v527 = vpack.c.b16 %v513, %v512
    %v528 = vpack.c.b16 %v515, %v514
    %v529 = vpack.c.b16 %v517, %v516
    %v530 = vpack.c.b16 %v519, %v518
    %v531 = vpack.c.b16 %v521, %v520
    %v532 = vpack.c.b16 %v523, %v522
    %v533 = vpack.c.b16 %v525, %v524
    %542 = vmatpush.bf16.msra.mxu0 %v533
    %543 = vmatpush.bf16.msra.mxu0 %v532
    %544 = vmatpush.bf16.msra.mxu0 %v531
    %545 = vmatpush.bf16.msra.mxu0 %v530
    %546 = vmatpush.bf16.msra.mxu0 %v529
    %547 = vmatpush.bf16.msra.mxu0 %v528
    %548 = vmatpush.bf16.msra.mxu0 %v527
    %549 = vmatpush.bf16.msra.mxu0 %v526
    %550 = vmatmul.bf16.gmra.mxu0 %v472
    %v551 = vpop.f32.mrf.mxu0
    %v552 = vadd.f32 %v493, %v551
    %v553 = vpop.f32.mrf.mxu0
    %554 = vdwg.mxu0
    %v555 = vmax.f32 %v552, 0.0
    %v556 = vpack.c.bf16 %v555, %v555
    %s557 = scalar_lea.vmem %s7, 64
    %v558 = vld [vmem:[%s557] sm:$0xf]
    %v559 = vld [vmem:[%s557 + $0x4] sm:$0xf]
    %v560 = vld [vmem:[%s557 + $0x8] sm:$0xf]
    %v561 = vld [vmem:[%s557 + $0xc] sm:$0xf]
    %v562 = vld [vmem:[%s557 + $0x10] sm:$0xf]
    %v563 = vld [vmem:[%s557 + $0x14] sm:$0xf]
    %v564 = vld [vmem:[%s557 + $0x18] sm:$0xf]
    %v565 = vld [vmem:[%s557 + $0x1c] sm:$0xf]
    %v566 = vld [vmem:[%s557 + $0x20] sm:$0xf]
    %v567 = vld [vmem:[%s557 + $0x24] sm:$0xf]
    %v568 = vld [vmem:[%s557 + $0x28] sm:$0xf]
    %v569 = vld [vmem:[%s557 + $0x2c] sm:$0xf]
    %v570 = vld [vmem:[%s557 + $0x30] sm:$0xf]
    %v571 = vld [vmem:[%s557 + $0x34] sm:$0xf]
    %v572 = vld [vmem:[%s557 + $0x38] sm:$0xf]
    %v573 = vld [vmem:[%s557 + $0x3c] sm:$0xf]
    %s574 = scalar_lea.vmem %s8, 1
    %v575 = vld [vmem:[%s574] sm:$0x1]
    %v576 = vunpack.c.l.bf16 %v575
    %v577 = vperm.slane %v576, 0
    %v594 = vunpack.c.l.b16 %v558
    %v595 = vunpack.c.l.b16 %v559
    %v596 = vunpack.c.l.b16 %v560
    %v597 = vunpack.c.l.b16 %v561
    %v598 = vunpack.c.l.b16 %v562
    %v599 = vunpack.c.l.b16 %v563
    %v600 = vunpack.c.l.b16 %v564
    %v601 = vunpack.c.l.b16 %v565
    %v602 = vunpack.c.l.b16 %v566
    %v603 = vunpack.c.l.b16 %v567
    %v604 = vunpack.c.l.b16 %v568
    %v605 = vunpack.c.l.b16 %v569
    %v606 = vunpack.c.l.b16 %v570
    %v607 = vunpack.c.l.b16 %v571
    %v608 = vunpack.c.l.b16 %v572
    %v609 = vunpack.c.l.b16 %v573
    %v610 = vpack.c.b16 %v595, %v594
    %v611 = vpack.c.b16 %v597, %v596
    %v612 = vpack.c.b16 %v599, %v598
    %v613 = vpack.c.b16 %v601, %v600
    %v614 = vpack.c.b16 %v603, %v602
    %v615 = vpack.c.b16 %v605, %v604
    %v616 = vpack.c.b16 %v607, %v606
    %v617 = vpack.c.b16 %v609, %v608
    %626 = vmatpush.bf16.msra.mxu0 %v617
    %627 = vmatpush.bf16.msra.mxu0 %v616
    %628 = vmatpush.bf16.msra.mxu0 %v615
    %629 = vmatpush.bf16.msra.mxu0 %v614
    %630 = vmatpush.bf16.msra.mxu0 %v613
    %631 = vmatpush.bf16.msra.mxu0 %v612
    %632 = vmatpush.bf16.msra.mxu0 %v611
    %633 = vmatpush.bf16.msra.mxu0 %v610
    %634 = vmatmul.bf16.gmra.mxu0 %v556
    %v635 = vpop.f32.mrf.mxu0
    %v636 = vadd.f32 %v577, %v635
    %v637 = vpop.f32.mrf.mxu0
    %638 = vdwg.mxu0
    %v639 = vpack.c.bf16 %v141, %v141
    %s640 = scalar_lea.vmem %s3, 128
    %v641 = vld [vmem:[%s640] sm:$0xf]
    %v642 = vld [vmem:[%s640 + $0x4] sm:$0xf]
    %v643 = vld [vmem:[%s640 + $0x8] sm:$0xf]
    %v644 = vld [vmem:[%s640 + $0xc] sm:$0xf]
    %v645 = vld [vmem:[%s640 + $0x10] sm:$0xf]
    %v646 = vld [vmem:[%s640 + $0x14] sm:$0xf]
    %v647 = vld [vmem:[%s640 + $0x18] sm:$0xf]
    %v648 = vld [vmem:[%s640 + $0x1c] sm:$0xf]
    %v649 = vld [vmem:[%s640 + $0x20] sm:$0xf]
    %v650 = vld [vmem:[%s640 + $0x24] sm:$0xf]
    %v651 = vld [vmem:[%s640 + $0x28] sm:$0xf]
    %v652 = vld [vmem:[%s640 + $0x2c] sm:$0xf]
    %v653 = vld [vmem:[%s640 + $0x30] sm:$0xf]
    %v654 = vld [vmem:[%s640 + $0x34] sm:$0xf]
    %v655 = vld [vmem:[%s640 + $0x38] sm:$0xf]
    %v656 = vld [vmem:[%s640 + $0x3c] sm:$0xf]
    %s657 = scalar_lea.vmem %s4, 2
    %v658 = vld [vmem:[%s657] sm:$0x1]
    %v659 = vunpack.c.l.bf16 %v658
    %v660 = vperm.slane %v659, 0
    %v677 = vunpack.c.l.b16 %v641
    %v678 = vunpack.c.l.b16 %v642
    %v679 = vunpack.c.l.b16 %v643
    %v680 = vunpack.c.l.b16 %v644
    %v681 = vunpack.c.l.b16 %v645
    %v682 = vunpack.c.l.b16 %v646
    %v683 = vunpack.c.l.b16 %v647
    %v684 = vunpack.c.l.b16 %v648
    %v685 = vunpack.c.l.b16 %v649
    %v686 = vunpack.c.l.b16 %v650
    %v687 = vunpack.c.l.b16 %v651
    %v688 = vunpack.c.l.b16 %v652
    %v689 = vunpack.c.l.b16 %v653
    %v690 = vunpack.c.l.b16 %v654
    %v691 = vunpack.c.l.b16 %v655
    %v692 = vunpack.c.l.b16 %v656
    %v693 = vpack.c.b16 %v678, %v677
    %v694 = vpack.c.b16 %v680, %v679
    %v695 = vpack.c.b16 %v682, %v681
    %v696 = vpack.c.b16 %v684, %v683
    %v697 = vpack.c.b16 %v686, %v685
    %v698 = vpack.c.b16 %v688, %v687
    %v699 = vpack.c.b16 %v690, %v689
    %v700 = vpack.c.b16 %v692, %v691
    %709 = vmatpush.bf16.msra.mxu0 %v700
    %710 = vmatpush.bf16.msra.mxu0 %v699
    %711 = vmatpush.bf16.msra.mxu0 %v698
    %712 = vmatpush.bf16.msra.mxu0 %v697
    %713 = vmatpush.bf16.msra.mxu0 %v696
    %714 = vmatpush.bf16.msra.mxu0 %v695
    %715 = vmatpush.bf16.msra.mxu0 %v694
    %716 = vmatpush.bf16.msra.mxu0 %v693
    %717 = vmatmul.bf16.gmra.mxu0 %v639
    %v718 = vpop.f32.mrf.mxu0
    %v719 = vadd.f32 %v660, %v718
    %v720 = vpop.f32.mrf.mxu0
    %721 = vdwg.mxu0
    %v722 = vmax.f32 %v719, 0.0
    %v723 = vpack.c.bf16 %v722, %v722
    %s724 = scalar_lea.vmem [#allocation2], 128
    %v725 = vld [vmem:[%s724] sm:$0xf]
    %v726 = vld [vmem:[%s724 + $0x4] sm:$0xf]
    %v727 = vld [vmem:[%s724 + $0x8] sm:$0xf]
    %v728 = vld [vmem:[%s724 + $0xc] sm:$0xf]
    %v729 = vld [vmem:[%s724 + $0x10] sm:$0xf]
    %v730 = vld [vmem:[%s724 + $0x14] sm:$0xf]
    %v731 = vld [vmem:[%s724 + $0x18] sm:$0xf]
    %v732 = vld [vmem:[%s724 + $0x1c] sm:$0xf]
    %v733 = vld [vmem:[%s724 + $0x20] sm:$0xf]
    %v734 = vld [vmem:[%s724 + $0x24] sm:$0xf]
    %v735 = vld [vmem:[%s724 + $0x28] sm:$0xf]
    %v736 = vld [vmem:[%s724 + $0x2c] sm:$0xf]
    %v737 = vld [vmem:[%s724 + $0x30] sm:$0xf]
    %v738 = vld [vmem:[%s724 + $0x34] sm:$0xf]
    %v739 = vld [vmem:[%s724 + $0x38] sm:$0xf]
    %v740 = vld [vmem:[%s724 + $0x3c] sm:$0xf]
    %s741 = scalar_lea.vmem %s6, 2
    %v742 = vld [vmem:[%s741] sm:$0x1]
    %v743 = vunpack.c.l.bf16 %v742
    %v744 = vperm.slane %v743, 0
    %v761 = vunpack.c.l.b16 %v725
    %v762 = vunpack.c.l.b16 %v726
    %v763 = vunpack.c.l.b16 %v727
    %v764 = vunpack.c.l.b16 %v728
    %v765 = vunpack.c.l.b16 %v729
    %v766 = vunpack.c.l.b16 %v730
    %v767 = vunpack.c.l.b16 %v731
    %v768 = vunpack.c.l.b16 %v732
    %v769 = vunpack.c.l.b16 %v733
    %v770 = vunpack.c.l.b16 %v734
    %v771 = vunpack.c.l.b16 %v735
    %v772 = vunpack.c.l.b16 %v736
    %v773 = vunpack.c.l.b16 %v737
    %v774 = vunpack.c.l.b16 %v738
    %v775 = vunpack.c.l.b16 %v739
    %v776 = vunpack.c.l.b16 %v740
    %v777 = vpack.c.b16 %v762, %v761
    %v778 = vpack.c.b16 %v764, %v763
    %v779 = vpack.c.b16 %v766, %v765
    %v780 = vpack.c.b16 %v768, %v767
    %v781 = vpack.c.b16 %v770, %v769
    %v782 = vpack.c.b16 %v772, %v771
    %v783 = vpack.c.b16 %v774, %v773
    %v784 = vpack.c.b16 %v776, %v775
    %793 = vmatpush.bf16.msra.mxu0 %v784
    %794 = vmatpush.bf16.msra.mxu0 %v783
    %795 = vmatpush.bf16.msra.mxu0 %v782
    %796 = vmatpush.bf16.msra.mxu0 %v781
    %797 = vmatpush.bf16.msra.mxu0 %v780
    %798 = vmatpush.bf16.msra.mxu0 %v779
    %799 = vmatpush.bf16.msra.mxu0 %v778
    %800 = vmatpush.bf16.msra.mxu0 %v777
    %801 = vmatmul.bf16.gmra.mxu0 %v723
    %v802 = vpop.f32.mrf.mxu0
    %v803 = vadd.f32 %v744, %v802
    %v804 = vpop.f32.mrf.mxu0
    %805 = vdwg.mxu0
    %v806 = vmax.f32 %v803, 0.0
    %v807 = vpack.c.bf16 %v806, %v806
    %s808 = scalar_lea.vmem %s7, 128
    %v809 = vld [vmem:[%s808] sm:$0xf]
    %v810 = vld [vmem:[%s808 + $0x4] sm:$0xf]
    %v811 = vld [vmem:[%s808 + $0x8] sm:$0xf]
    %v812 = vld [vmem:[%s808 + $0xc] sm:$0xf]
    %v813 = vld [vmem:[%s808 + $0x10] sm:$0xf]
    %v814 = vld [vmem:[%s808 + $0x14] sm:$0xf]
    %v815 = vld [vmem:[%s808 + $0x18] sm:$0xf]
    %v816 = vld [vmem:[%s808 + $0x1c] sm:$0xf]
    %v817 = vld [vmem:[%s808 + $0x20] sm:$0xf]
    %v818 = vld [vmem:[%s808 + $0x24] sm:$0xf]
    %v819 = vld [vmem:[%s808 + $0x28] sm:$0xf]
    %v820 = vld [vmem:[%s808 + $0x2c] sm:$0xf]
    %v821 = vld [vmem:[%s808 + $0x30] sm:$0xf]
    %v822 = vld [vmem:[%s808 + $0x34] sm:$0xf]
    %v823 = vld [vmem:[%s808 + $0x38] sm:$0xf]
    %v824 = vld [vmem:[%s808 + $0x3c] sm:$0xf]
    %s825 = scalar_lea.vmem %s8, 2
    %v826 = vld [vmem:[%s825] sm:$0x1]
    %v827 = vunpack.c.l.bf16 %v826
    %v828 = vperm.slane %v827, 0
    %v845 = vunpack.c.l.b16 %v809
    %v846 = vunpack.c.l.b16 %v810
    %v847 = vunpack.c.l.b16 %v811
    %v848 = vunpack.c.l.b16 %v812
    %v849 = vunpack.c.l.b16 %v813
    %v850 = vunpack.c.l.b16 %v814
    %v851 = vunpack.c.l.b16 %v815
    %v852 = vunpack.c.l.b16 %v816
    %v853 = vunpack.c.l.b16 %v817
    %v854 = vunpack.c.l.b16 %v818
    %v855 = vunpack.c.l.b16 %v819
    %v856 = vunpack.c.l.b16 %v820
    %v857 = vunpack.c.l.b16 %v821
    %v858 = vunpack.c.l.b16 %v822
    %v859 = vunpack.c.l.b16 %v823
    %v860 = vunpack.c.l.b16 %v824
    %v861 = vpack.c.b16 %v846, %v845
    %v862 = vpack.c.b16 %v848, %v847
    %v863 = vpack.c.b16 %v850, %v849
    %v864 = vpack.c.b16 %v852, %v851
    %v865 = vpack.c.b16 %v854, %v853
    %v866 = vpack.c.b16 %v856, %v855
    %v867 = vpack.c.b16 %v858, %v857
    %v868 = vpack.c.b16 %v860, %v859
    %877 = vmatpush.bf16.msra.mxu0 %v868
    %878 = vmatpush.bf16.msra.mxu0 %v867
    %879 = vmatpush.bf16.msra.mxu0 %v866
    %880 = vmatpush.bf16.msra.mxu0 %v865
    %881 = vmatpush.bf16.msra.mxu0 %v864
    %882 = vmatpush.bf16.msra.mxu0 %v863
    %883 = vmatpush.bf16.msra.mxu0 %v862
    %884 = vmatpush.bf16.msra.mxu0 %v861
    %885 = vmatmul.bf16.gmra.mxu0 %v807
    %v886 = vpop.f32.mrf.mxu0
    %v887 = vadd.f32 %v828, %v886
    %v888 = vpop.f32.mrf.mxu0
    %889 = vdwg.mxu0
    %v890 = vpack.c.bf16 %v142, %v142
    %s891 = scalar_lea.vmem %s3, 192
    %v892 = vld [vmem:[%s891] sm:$0xf]
    %v893 = vld [vmem:[%s891 + $0x4] sm:$0xf]
    %v894 = vld [vmem:[%s891 + $0x8] sm:$0xf]
    %v895 = vld [vmem:[%s891 + $0xc] sm:$0xf]
    %v896 = vld [vmem:[%s891 + $0x10] sm:$0xf]
    %v897 = vld [vmem:[%s891 + $0x14] sm:$0xf]
    %v898 = vld [vmem:[%s891 + $0x18] sm:$0xf]
    %v899 = vld [vmem:[%s891 + $0x1c] sm:$0xf]
    %v900 = vld [vmem:[%s891 + $0x20] sm:$0xf]
    %v901 = vld [vmem:[%s891 + $0x24] sm:$0xf]
    %v902 = vld [vmem:[%s891 + $0x28] sm:$0xf]
    %v903 = vld [vmem:[%s891 + $0x2c] sm:$0xf]
    %v904 = vld [vmem:[%s891 + $0x30] sm:$0xf]
    %v905 = vld [vmem:[%s891 + $0x34] sm:$0xf]
    %v906 = vld [vmem:[%s891 + $0x38] sm:$0xf]
    %v907 = vld [vmem:[%s891 + $0x3c] sm:$0xf]
    %s908 = scalar_lea.vmem %s4, 3
    %v909 = vld [vmem:[%s908] sm:$0x1]
    %v910 = vunpack.c.l.bf16 %v909
    %v911 = vperm.slane %v910, 0
    %v928 = vunpack.c.l.b16 %v892
    %v929 = vunpack.c.l.b16 %v893
    %v930 = vunpack.c.l.b16 %v894
    %v931 = vunpack.c.l.b16 %v895
    %v932 = vunpack.c.l.b16 %v896
    %v933 = vunpack.c.l.b16 %v897
    %v934 = vunpack.c.l.b16 %v898
    %v935 = vunpack.c.l.b16 %v899
    %v936 = vunpack.c.l.b16 %v900
    %v937 = vunpack.c.l.b16 %v901
    %v938 = vunpack.c.l.b16 %v902
    %v939 = vunpack.c.l.b16 %v903
    %v940 = vunpack.c.l.b16 %v904
    %v941 = vunpack.c.l.b16 %v905
    %v942 = vunpack.c.l.b16 %v906
    %v943 = vunpack.c.l.b16 %v907
    %v944 = vpack.c.b16 %v929, %v928
    %v945 = vpack.c.b16 %v931, %v930
    %v946 = vpack.c.b16 %v933, %v932
    %v947 = vpack.c.b16 %v935, %v934
    %v948 = vpack.c.b16 %v937, %v936
    %v949 = vpack.c.b16 %v939, %v938
    %v950 = vpack.c.b16 %v941, %v940
    %v951 = vpack.c.b16 %v943, %v942
    %960 = vmatpush.bf16.msra.mxu0 %v951
    %961 = vmatpush.bf16.msra.mxu0 %v950
    %962 = vmatpush.bf16.msra.mxu0 %v949
    %963 = vmatpush.bf16.msra.mxu0 %v948
    %964 = vmatpush.bf16.msra.mxu0 %v947
    %965 = vmatpush.bf16.msra.mxu0 %v946
    %966 = vmatpush.bf16.msra.mxu0 %v945
    %967 = vmatpush.bf16.msra.mxu0 %v944
    %968 = vmatmul.bf16.gmra.mxu0 %v890
    %v969 = vpop.f32.mrf.mxu0
    %v970 = vadd.f32 %v911, %v969
    %v971 = vpop.f32.mrf.mxu0
    %972 = vdwg.mxu0
    %v973 = vmax.f32 %v970, 0.0
    %v974 = vpack.c.bf16 %v973, %v973
    %s975 = scalar_lea.vmem [#allocation2], 192
    %v976 = vld [vmem:[%s975] sm:$0xf]
    %v977 = vld [vmem:[%s975 + $0x4] sm:$0xf]
    %v978 = vld [vmem:[%s975 + $0x8] sm:$0xf]
    %v979 = vld [vmem:[%s975 + $0xc] sm:$0xf]
    %v980 = vld [vmem:[%s975 + $0x10] sm:$0xf]
    %v981 = vld [vmem:[%s975 + $0x14] sm:$0xf]
    %v982 = vld [vmem:[%s975 + $0x18] sm:$0xf]
    %v983 = vld [vmem:[%s975 + $0x1c] sm:$0xf]
    %v984 = vld [vmem:[%s975 + $0x20] sm:$0xf]
    %v985 = vld [vmem:[%s975 + $0x24] sm:$0xf]
    %v986 = vld [vmem:[%s975 + $0x28] sm:$0xf]
    %v987 = vld [vmem:[%s975 + $0x2c] sm:$0xf]
    %v988 = vld [vmem:[%s975 + $0x30] sm:$0xf]
    %v989 = vld [vmem:[%s975 + $0x34] sm:$0xf]
    %v990 = vld [vmem:[%s975 + $0x38] sm:$0xf]
    %v991 = vld [vmem:[%s975 + $0x3c] sm:$0xf]
    %s992 = scalar_lea.vmem %s6, 3
    %v993 = vld [vmem:[%s992] sm:$0x1]
    %v994 = vunpack.c.l.bf16 %v993
    %v995 = vperm.slane %v994, 0
    %v1012 = vunpack.c.l.b16 %v976
    %v1013 = vunpack.c.l.b16 %v977
    %v1014 = vunpack.c.l.b16 %v978
    %v1015 = vunpack.c.l.b16 %v979
    %v1016 = vunpack.c.l.b16 %v980
    %v1017 = vunpack.c.l.b16 %v981
    %v1018 = vunpack.c.l.b16 %v982
    %v1019 = vunpack.c.l.b16 %v983
    %v1020 = vunpack.c.l.b16 %v984
    %v1021 = vunpack.c.l.b16 %v985
    %v1022 = vunpack.c.l.b16 %v986
    %v1023 = vunpack.c.l.b16 %v987
    %v1024 = vunpack.c.l.b16 %v988
    %v1025 = vunpack.c.l.b16 %v989
    %v1026 = vunpack.c.l.b16 %v990
    %v1027 = vunpack.c.l.b16 %v991
    %v1028 = vpack.c.b16 %v1013, %v1012
    %v1029 = vpack.c.b16 %v1015, %v1014
    %v1030 = vpack.c.b16 %v1017, %v1016
    %v1031 = vpack.c.b16 %v1019, %v1018
    %v1032 = vpack.c.b16 %v1021, %v1020
    %v1033 = vpack.c.b16 %v1023, %v1022
    %v1034 = vpack.c.b16 %v1025, %v1024
    %v1035 = vpack.c.b16 %v1027, %v1026
    %1044 = vmatpush.bf16.msra.mxu0 %v1035
    %1045 = vmatpush.bf16.msra.mxu0 %v1034
    %1046 = vmatpush.bf16.msra.mxu0 %v1033
    %1047 = vmatpush.bf16.msra.mxu0 %v1032
    %1048 = vmatpush.bf16.msra.mxu0 %v1031
    %1049 = vmatpush.bf16.msra.mxu0 %v1030
    %1050 = vmatpush.bf16.msra.mxu0 %v1029
    %1051 = vmatpush.bf16.msra.mxu0 %v1028
    %1052 = vmatmul.bf16.gmra.mxu0 %v974
    %v1053 = vpop.f32.mrf.mxu0
    %v1054 = vadd.f32 %v995, %v1053
    %v1055 = vpop.f32.mrf.mxu0
    %1056 = vdwg.mxu0
    %v1057 = vmax.f32 %v1054, 0.0
    %v1058 = vpack.c.bf16 %v1057, %v1057
    %s1059 = scalar_lea.vmem %s7, 192
    %v1060 = vld [vmem:[%s1059] sm:$0xf]
    %v1061 = vld [vmem:[%s1059 + $0x4] sm:$0xf]
    %v1062 = vld [vmem:[%s1059 + $0x8] sm:$0xf]
    %v1063 = vld [vmem:[%s1059 + $0xc] sm:$0xf]
    %v1064 = vld [vmem:[%s1059 + $0x10] sm:$0xf]
    %v1065 = vld [vmem:[%s1059 + $0x14] sm:$0xf]
    %v1066 = vld [vmem:[%s1059 + $0x18] sm:$0xf]
    %v1067 = vld [vmem:[%s1059 + $0x1c] sm:$0xf]
    %v1068 = vld [vmem:[%s1059 + $0x20] sm:$0xf]
    %v1069 = vld [vmem:[%s1059 + $0x24] sm:$0xf]
    %v1070 = vld [vmem:[%s1059 + $0x28] sm:$0xf]
    %v1071 = vld [vmem:[%s1059 + $0x2c] sm:$0xf]
    %v1072 = vld [vmem:[%s1059 + $0x30] sm:$0xf]
    %v1073 = vld [vmem:[%s1059 + $0x34] sm:$0xf]
    %v1074 = vld [vmem:[%s1059 + $0x38] sm:$0xf]
    %v1075 = vld [vmem:[%s1059 + $0x3c] sm:$0xf]
    %s1076 = scalar_lea.vmem %s8, 3
    %v1077 = vld [vmem:[%s1076] sm:$0x1]
    %v1078 = vunpack.c.l.bf16 %v1077
    %v1079 = vperm.slane %v1078, 0
    %v1096 = vunpack.c.l.b16 %v1060
    %v1097 = vunpack.c.l.b16 %v1061
    %v1098 = vunpack.c.l.b16 %v1062
    %v1099 = vunpack.c.l.b16 %v1063
    %v1100 = vunpack.c.l.b16 %v1064
    %v1101 = vunpack.c.l.b16 %v1065
    %v1102 = vunpack.c.l.b16 %v1066
    %v1103 = vunpack.c.l.b16 %v1067
    %v1104 = vunpack.c.l.b16 %v1068
    %v1105 = vunpack.c.l.b16 %v1069
    %v1106 = vunpack.c.l.b16 %v1070
    %v1107 = vunpack.c.l.b16 %v1071
    %v1108 = vunpack.c.l.b16 %v1072
    %v1109 = vunpack.c.l.b16 %v1073
    %v1110 = vunpack.c.l.b16 %v1074
    %v1111 = vunpack.c.l.b16 %v1075
    %v1112 = vpack.c.b16 %v1097, %v1096
    %v1113 = vpack.c.b16 %v1099, %v1098
    %v1114 = vpack.c.b16 %v1101, %v1100
    %v1115 = vpack.c.b16 %v1103, %v1102
    %v1116 = vpack.c.b16 %v1105, %v1104
    %v1117 = vpack.c.b16 %v1107, %v1106
    %v1118 = vpack.c.b16 %v1109, %v1108
    %v1119 = vpack.c.b16 %v1111, %v1110
    %1128 = vmatpush.bf16.msra.mxu0 %v1119
    %1129 = vmatpush.bf16.msra.mxu0 %v1118
    %1130 = vmatpush.bf16.msra.mxu0 %v1117
    %1131 = vmatpush.bf16.msra.mxu0 %v1116
    %1132 = vmatpush.bf16.msra.mxu0 %v1115
    %1133 = vmatpush.bf16.msra.mxu0 %v1114
    %1134 = vmatpush.bf16.msra.mxu0 %v1113
    %1135 = vmatpush.bf16.msra.mxu0 %v1112
    %1136 = vmatmul.bf16.gmra.mxu0 %v1058
    %v1137 = vpop.f32.mrf.mxu0
    %v1138 = vadd.f32 %v1079, %v1137
    %v1139 = vpop.f32.mrf.mxu0
    %1140 = vdwg.mxu0
    %v1141 = vadd.f32 %v385, %v636
    %v1142 = vadd.f32 %v1141, %v887
    %v1143 = vadd.f32 %v1142, %v1138
    %v1144 = vmul.f32 %v1143, 0.25
    %v1145 = vsub.f32 %v385, %v1144
    %v1146 = vmul.f32 %v1145, %v1145
    %v1147 = vsub.f32 %v636, %v1144
    %v1148 = vmul.f32 %v1147, %v1147
    %v1149 = vadd.f32 %v1146, %v1148
    %v1150 = vsub.f32 %v887, %v1144
    %v1151 = vmul.f32 %v1150, %v1150
    %v1152 = vadd.f32 %v1149, %v1151
    %v1153 = vsub.f32 %v1138, %v1144
    %v1154 = vmul.f32 %v1153, %v1153
    %v1155 = vadd.f32 %v1152, %v1154
    %v1156 = vmul.f32 %v1155, 0.33333334
    %1157 = vst.msk [vmem:[%s9] sm:$0xff] %vm74, %v1144
    %v1158 = vlog2.pop %v1156
    %v1159 = vmul.f32 %v1158, 0.6931472
    %1160 = vst.msk [vmem:[%s10] sm:$0xff] %vm74, %v1159
    // Predicated region
    $region42: #{bnn_ensemble_forward.1} parent=1 // pred_check
      _
    $region43: #{bnn_ensemble_forward.1} parent=1 // pred_check_branch
      %1162 = sbr.rel (0) target = $region45
    $region44: #{bnn_ensemble_forward.1} parent=1 // pred_region
      _
    $region45: #{bnn_ensemble_forward.1} parent=1 // pred_fallthru
      _
    // Predicated region
    $region46: #{bnn_ensemble_forward.1} parent=1 // pred_check
      _
    $region47: #{bnn_ensemble_forward.1} parent=1 // pred_check_branch
      %1164 = sbr.rel (0) target = $region49
    $region48: #{bnn_ensemble_forward.1} parent=1 // pred_region
      _
    $region49: #{bnn_ensemble_forward.1} parent=1 // pred_fallthru
      _
    // Predicated region
    $region50: #{bnn_ensemble_forward.1} parent=1 // pred_check
      _
    $region51: #{bnn_ensemble_forward.1} parent=1 // pred_check_branch
      %1166 = sbr.rel (0) target = $region53
    $region52: #{bnn_ensemble_forward.1} parent=1 // pred_region
      _
    $region53: #{bnn_ensemble_forward.1} parent=1 // pred_fallthru
      _
    // Predicated region
    $region54: #{bnn_ensemble_forward.1} parent=1 // pred_check
      _
    $region55: #{bnn_ensemble_forward.1} parent=1 // pred_check_branch
      %1168 = sbr.rel (0) target = $region57
    $region56: #{bnn_ensemble_forward.1} parent=1 // pred_region
      _
    $region57: #{bnn_ensemble_forward.1} parent=1 // pred_fallthru
      _
    %1169 = vsyncpa [#allocation3], 1

</llo_original>
